<compile_context>
chip_gen: v7x
topology: tpu7x:2x2x1
jax: 0.10.0
libtpu: 0.0.40
codegen_flags: <defaults>
</compile_context>

<pallas_src>
import jax
import jax.numpy as jnp
from jax import lax
from jax.experimental import pallas as pl
from jax.experimental.pallas import tpu as pltpu


def _round_up(a, m):
    return (a + m - 1) // m * m


# ----------------------------------------------------------------------------
# Pallas kernel: one fused matmul + bias per (batch, row-tile) grid point.
#   x_ref    : (TS, K_pad)     bf16  packed im2col taps (+ y) for TS output voxels
#   w_ref    : (K_pad, Co_pad) bf16  folded weights (branch convs x final 1x1 conv)
#   bias_ref : (1, Co_pad)     f32   per-batch folded bias (incl. global-mean branch)
#   o_ref    : (TS, Co_pad)    f32
# ----------------------------------------------------------------------------
def _ueb_kernel(x_ref, w_ref, bias_ref, o_ref):
    acc = jnp.dot(x_ref[...], w_ref[...], preferred_element_type=jnp.float32)
    o_ref[...] = (acc + bias_ref[...]).astype(o_ref.dtype)


# ----------------------------------------------------------------------------
# JAX glue (im2col packed along the contraction dim, weight folding, padding)
# ----------------------------------------------------------------------------
def _extract_taps_k(x_cl, pad, dil, stride=2, k=3):
    """x_cl: (N, D, H, W, C). Returns (N, Do*Ho*Wo, 27*C), K ordered tap-major."""
    N, D, H, W, C = x_cl.shape
    Do = (D + 2 * pad - dil * (k - 1) - 1) // stride + 1
    Ho = (H + 2 * pad - dil * (k - 1) - 1) // stride + 1
    Wo = (W + 2 * pad - dil * (k - 1) - 1) // stride + 1
    xp = jnp.pad(x_cl, ((0, 0), (pad, pad), (pad, pad), (pad, pad), (0, 0)))
    taps = []
    for kd in range(k):
        for kh in range(k):
            for kw in range(k):
                sl = xp[:,
                        kd * dil: kd * dil + stride * (Do - 1) + 1: stride,
                        kh * dil: kh * dil + stride * (Ho - 1) + 1: stride,
                        kw * dil: kw * dil + stride * (Wo - 1) + 1: stride,
                        :]
                taps.append(sl.reshape(N, Do * Ho * Wo, C))
    return jnp.concatenate(taps, axis=-1), (Do, Ho, Wo)


def _tap_weights(w_pt):
    """(Co, Ci, 3, 3, 3) PyTorch layout -> (27, Ci, Co) tap-major matmul layout."""
    Co, Ci = w_pt.shape[0], w_pt.shape[1]
    return jnp.transpose(w_pt, (2, 3, 4, 1, 0)).reshape(27, Ci, Co)


def uncoupled_encoding_block(x, y, params):
    """Forward pass.  x: (N, Cin, D, H, W), y: (N, Cout, D/2, H/2, W/2)  (NCDHW)."""
    N, Ci, D, H, W = x.shape
    Co = params["b_out"].shape[0]
    assert D % 2 == 0 and H % 2 == 0 and W % 2 == 0
    Do, Ho, Wo = D // 2, H // 2, W // 2
    So = Do * Ho * Wo
    f32 = jnp.float32

    x_cl = jnp.transpose(x, (0, 2, 3, 4, 1)).astype(f32)               # (N, D, H, W, Ci)
    y_cl = jnp.transpose(y, (0, 2, 3, 4, 1)).reshape(N, So, Co).astype(f32)

    # --- packed im2col (taps in the contraction dim) for the 4 dilated branches ------
    # TODO(synk): build the 27 taps in-kernel from a halo'd x tile to remove the 108x
    #             HBM im2col read amplification (kept in the wrapper for robustness).
    blocks = []
    for pad, dil in ((1, 1), (4, 4), (8, 8), (12, 12)):
        taps, osz = _extract_taps_k(x_cl, pad, dil)
        assert osz == (Do, Ho, Wo)
        blocks.append(taps)                                            # (N, So, 27*Ci)
    x_packed = jnp.concatenate(blocks + [y_cl], axis=-1)               # (N, So, 108*Ci+Co)
    K_raw = 108 * Ci + Co

    # --- fold the final 1x1x1 conv into every branch ----------------------------------
    # cat order: [fea, e0(conv2), e1(ab1), e2(ab6), e3(ab12), e4(ab18), y]
    wout = params["w_out"][:, :, 0, 0, 0].T.astype(f32)                # (7*Co, Co)
    wout_blk = [wout[j * Co:(j + 1) * Co, :] for j in range(7)]        # each (Co, Co)

    folded = []
    bias_const = params["b_out"].astype(f32)                           # (Co,)
    for wk, bk, oj in (("w_conv2", "b_conv2", 1), ("w_ab6", "b_ab6", 3),
                       ("w_ab12", "b_ab12", 4), ("w_ab18", "b_ab18", 5)):
        w3 = _tap_weights(params[wk].astype(f32))                      # (27, Ci, Co)
        folded.append(jnp.einsum("tic,co->tio", w3, wout_blk[oj]))     # (27, Ci, Co)
        bias_const = bias_const + params[bk].astype(f32) @ wout_blk[oj]

    # ab1 (1x1x1, stride 2) == centre tap (1,1,1) -> index 13 of the conv2 branch.
    w_ab1 = params["w_ab1"][:, :, 0, 0, 0].T.astype(f32)               # (Ci, Co)
    folded[0] = folded[0].at[13].add(w_ab1 @ wout_blk[2])
    bias_const = bias_const + params["b_ab1"].astype(f32) @ wout_blk[2]

    w_packed = jnp.concatenate([w.reshape(27 * Ci, Co) for w in folded]
                               + [wout_blk[6]], axis=0)                # (K_raw, Co)

    # --- global-mean branch -> per-batch bias row --------------------------------------
    mean_x = jnp.mean(x_cl.reshape(N, D * H * W, Ci), axis=1)          # (N, Ci)
    w_conv = params["w_conv"][:, :, 0, 0, 0].T.astype(f32)             # (Ci, Co)
    fea = mean_x @ w_conv + params["b_conv"].astype(f32)               # (N, Co)
    bias_full = bias_const[None, :] + fea @ wout_blk[0]                # (N, Co)

    # --- TPU-friendly padding / tiling --------------------------------------------------
    Co_pad = _round_up(Co, 128)            # lane-dense output stores
    K_pad = _round_up(K_raw, 256)          # full-width MXU contraction

    # Row tile sized so double-buffered streams stay well under the scoped VMEM limit
    # on every generation (incl. v7x's 64 MiB physical VMEM).
    bytes_per_row = 2 * (K_pad * 2 + Co_pad * 4)                       # bf16 in, f32 out
    ts_cap = max(8, (8 * 1024 * 1024 // bytes_per_row) // 8 * 8)
    TS = min(512, ts_cap, _round_up(So, 8))
    So_pad = _round_up(So, TS)

    x_packed = jnp.pad(x_packed, ((0, 0), (0, So_pad - So), (0, K_pad - K_raw))
                       ).astype(jnp.bfloat16)
    w_packed = jnp.pad(w_packed, ((0, K_pad - K_raw), (0, Co_pad - Co))
                       ).astype(jnp.bfloat16)
    bias_full = jnp.pad(bias_full, ((0, 0), (0, Co_pad - Co)))[:, None, :]  # (N,1,Co_pad)

    out = pl.pallas_call(
        _ueb_kernel,
        out_shape=jax.ShapeDtypeStruct((N, So_pad, Co_pad), jnp.float32),
        grid_spec=pltpu.PrefetchScalarGridSpec(
            num_scalar_prefetch=0,
            grid=(N, So_pad // TS),
            in_specs=[
                pl.BlockSpec((None, TS, K_pad), lambda n, s: (n, s, 0)),
                pl.BlockSpec((K_pad, Co_pad), lambda n, s: (0, 0)),
                pl.BlockSpec((None, 1, Co_pad), lambda n, s: (n, 0, 0)),
            ],
            out_specs=pl.BlockSpec((None, TS, Co_pad), lambda n, s: (n, s, 0)),
        ),
        compiler_params=pltpu.CompilerParams(
            dimension_semantics=("parallel", "parallel"),
        ),
    )(x_packed, w_packed, bias_full)

    out = out[:, :So, :Co].reshape(N, Do, Ho, Wo, Co)
    return jnp.transpose(out, (0, 4, 1, 2, 3))


# ----------------------------------------------------------------------------
# Pure-JAX reference (lax.conv_general_dilated, f32) for correctness checking.
# ----------------------------------------------------------------------------
_DN = ("NCDHW", "OIDHW", "NCDHW")


def _conv3d_ref(x, w, b, stride, pad, dil):
    out = lax.conv_general_dilated(
        x, w, window_strides=(stride,) * 3, padding=[(pad, pad)] * 3,
        rhs_dilation=(dil,) * 3, dimension_numbers=_DN,
        precision=lax.Precision.HIGHEST)
    return out + b[None, :, None, None, None]


def reference_forward(x, y, params):
    N, Ci, D, H, W = x.shape
    Co = params["b_out"].shape[0]
    size = (D // 2, H // 2, W // 2)
    fea = jnp.mean(x, axis=(2, 3, 4), keepdims=True)
    fea = _conv3d_ref(fea, params["w_conv"], params["b_conv"], 2, 0, 1)
    fea = jnp.broadcast_to(fea, (N, Co) + size)   # trilinear upsample of a 1x1x1 map
    e0 = _conv3d_ref(x, params["w_conv2"], params["b_conv2"], 2, 1, 1)
    e1 = _conv3d_ref(x, params["w_ab1"], params["b_ab1"], 2, 0, 1)
    e2 = _conv3d_ref(x, params["w_ab6"], params["b_ab6"], 2, 4, 4)
    e3 = _conv3d_ref(x, params["w_ab12"], params["b_ab12"], 2, 8, 8)
    e4 = _conv3d_ref(x, params["w_ab18"], params["b_ab18"], 2, 12, 12)
    cat = jnp.concatenate([fea, e0, e1, e2, e3, e4, y], axis=1)
    return _conv3d_ref(cat, params["w_out"], params["b_out"], 1, 0, 1)


# ----------------------------------------------------------------------------
# Deterministic parameter init (PyTorch Conv3d weight layouts) + demo.
# ----------------------------------------------------------------------------
def make_params(key, in_ch, out_ch):
    ks = jax.random.split(key, 16)
    def w(k, shape, scale=0.1):
        return scale * jax.random.normal(k, shape, dtype=jnp.float32)
    return {
        "w_conv":  w(ks[0],  (out_ch, in_ch, 1, 1, 1)), "b_conv":  w(ks[1],  (out_ch,)),
        "w_conv2": w(ks[2],  (out_ch, in_ch, 3, 3, 3)), "b_conv2": w(ks[3],  (out_ch,)),
        "w_ab1":   w(ks[4],  (out_ch, in_ch, 1, 1, 1)), "b_ab1":   w(ks[5],  (out_ch,)),
        "w_ab6":   w(ks[6],  (out_ch, in_ch, 3, 3, 3)), "b_ab6":   w(ks[7],  (out_ch,)),
        "w_ab12":  w(ks[8],  (out_ch, in_ch, 3, 3, 3)), "b_ab12":  w(ks[9],  (out_ch,)),
        "w_ab18":  w(ks[10], (out_ch, in_ch, 3, 3, 3)), "b_ab18":  w(ks[11], (out_ch,)),
        "w_out":   w(ks[12], (out_ch, out_ch * 7, 1, 1, 1)), "b_out": w(ks[13], (out_ch,)),
    }


if __name__ == "__main__":
    N, Ci, Co = 2, 4, 8
    D = H = W = 8

    key = jax.random.PRNGKey(0)
    kp, kx, ky = jax.random.split(key, 3)
    params = make_params(kp, Ci, Co)
    x = jax.random.normal(kx, (N, Ci, D, H, W), dtype=jnp.float32)
    y = jax.random.normal(ky, (N, Co, D // 2, H // 2, W // 2), dtype=jnp.float32)

    out = uncoupled_encoding_block(x, y, params)
    out = jax.block_until_ready(out)

    ref = reference_forward(x, y, params)
    assert out.shape == ref.shape == (N, Co, D // 2, H // 2, W // 2), (out.shape, ref.shape)
    max_diff = float(jnp.max(jnp.abs(out - ref)))
    # bf16 streaming data + folded bf16 weights (f32 MXU accumulation)
    assert max_diff < 2e-2, f"mismatch vs reference: max abs diff = {max_diff}"

    print("KERNEL_OK")
</pallas_src>

<mosaic_0001>
module attributes {stable_mosaic.version = 11 : i64} {
  func.func @_ueb_kernel(%arg0: i32, %arg1: i32, %arg2: memref<1x64x512xbf16, #tpu.memory_space<vmem>>, %arg3: memref<512x128xbf16, #tpu.memory_space<vmem>>, %arg4: memref<1x1x128xf32, #tpu.memory_space<vmem>>, %arg5: memref<1x64x128xf32, #tpu.memory_space<vmem>>) attributes {dimension_semantics = [#tpu.dimension_semantics<parallel>, #tpu.dimension_semantics<parallel>], iteration_bounds = array<i64: 2, 1>, scalar_prefetch = 0 : i64, scratch_operands = 0 : i64, tpu.core_type = #tpu.core_type<tc>, window_params = [{transform_indices = @transform_0, window_bounds = array<i64: 1, 64, 512>}, {pipeline_mode = #tpu.pipeline_mode<synchronous>, transform_indices = @transform_1, window_bounds = array<i64: 512, 128>}, {transform_indices = @transform_2, window_bounds = array<i64: 1, 1, 128>}, {transform_indices = @transform_3, window_bounds = array<i64: 1, 64, 128>}]} {
    %c0 = arith.constant 0 : index
    %c0_0 = arith.constant 0 : index
    %c0_1 = arith.constant 0 : index
    %0 = vector.load %arg2[%c0, %c0_0, %c0_1] : memref<1x64x512xbf16, #tpu.memory_space<vmem>>, vector<1x64x512xbf16>
    %1 = vector.shape_cast %0 : vector<1x64x512xbf16> to vector<64x512xbf16>
    %c0_2 = arith.constant 0 : index
    %c0_3 = arith.constant 0 : index
    %2 = vector.load %arg3[%c0_2, %c0_3] : memref<512x128xbf16, #tpu.memory_space<vmem>>, vector<512x128xbf16>
    %cst = arith.constant dense<0.000000e+00> : vector<64x128xf32>
    %3 = tpu.matmul %1, %2, %cst {dimension_numbers = #tpu.dot_dimension_numbers<[1], [0], [0], [1], [0, 0, 1, 1], [], []>} : vector<64x512xbf16>, vector<512x128xbf16>, vector<64x128xf32> -> vector<64x128xf32>
    %c0_4 = arith.constant 0 : index
    %c0_5 = arith.constant 0 : index
    %c0_6 = arith.constant 0 : index
    %4 = vector.load %arg4[%c0_4, %c0_5, %c0_6] : memref<1x1x128xf32, #tpu.memory_space<vmem>>, vector<1x1x128xf32>
    %5 = vector.shape_cast %4 : vector<1x1x128xf32> to vector<1x128xf32>
    %6 = vector.broadcast %5 : vector<1x128xf32> to vector<64x128xf32>
    %7 = arith.addf %3, %6 : vector<64x128xf32>
    %c0_7 = arith.constant 0 : index
    %c0_8 = arith.constant 0 : index
    %c0_9 = arith.constant 0 : index
    %8 = vector.load %arg5[%c0_7, %c0_8, %c0_9] : memref<1x64x128xf32, #tpu.memory_space<vmem>>, vector<1x64x128xf32>
    %9 = vector.shape_cast %8 : vector<1x64x128xf32> to vector<64x128xf32>
    %10 = vector.shape_cast %7 : vector<64x128xf32> to vector<1x64x128xf32>
    tpu.vector_store %arg5[%c0_7, %c0_8, %c0_9], %10 {strides = array<i32>} : memref<1x64x128xf32, #tpu.memory_space<vmem>>, vector<1x64x128xf32>,
    return
  }
  func.func @transform_0(%arg0: i32, %arg1: i32) -> (i32, i32, i32) {
    %c0_i32 = arith.constant 0 : i32
    %c0_i32_0 = arith.constant 0 : i32
    return %arg0, %arg1, %c0_i32 : i32, i32, i32
  }
  func.func @transform_1(%arg0: i32, %arg1: i32) -> (i32, i32) {
    %c0_i32 = arith.constant 0 : i32
    %c0_i32_0 = arith.constant 0 : i32
    %c0_i32_1 = arith.constant 0 : i32
    return %c0_i32, %c0_i32_0 : i32, i32
  }
  func.func @transform_2(%arg0: i32, %arg1: i32) -> (i32, i32, i32) {
    %c0_i32 = arith.constant 0 : i32
    %c0_i32_0 = arith.constant 0 : i32
    %c0_i32_1 = arith.constant 0 : i32
    return %arg0, %c0_i32, %c0_i32_0 : i32, i32, i32
  }
  func.func @transform_3(%arg0: i32, %arg1: i32) -> (i32, i32, i32) {
    %c0_i32 = arith.constant 0 : i32
    %c0_i32_0 = arith.constant 0 : i32
    return %arg0, %arg1, %c0_i32 : i32, i32, i32
  }
}

</mosaic_0001>

<llo_original>
// kernel: tpu_custom_call.1
$region0: #{tpu_custom_call.1}
  #allocation0 [shape = 'u32[]', space=smem, size = 0x4, offset = 0x4, fixed_abs, tag = 'smem constant byte address 0x4 - core index']
  #allocation1 [shape = 'u32[144,128]{1,0:T(1,128)}', space=vmem, size = 0x12000, scoped, tag = 'internal scratch']
  %s0 = inlined_call_operand.hbm [shape: bf16[2,64,512], index: 0, kind: input, shape index: {}]
  %s1 = inlined_call_operand.hbm [shape: bf16[512,128], index: 1, kind: input, shape index: {}]
  %s2 = inlined_call_operand.vmem [shape: f32[2,1,128], index: 2, kind: input, shape index: {}]
  %s3 = inlined_call_operand.hbm [shape: f32[2,64,128], index: 3, kind: output, shape index: {}]
  %s4 = sld [smem:[#allocation0]]
  $region53: #{tpu_custom_call.1} parent=0
    _
  %s6 = ssub.s32 1, %s4
  %s7 = scalar_select 0, %s6, %s4
  $region1: #{tpu_custom_call.1} parent=0
    #allocation2 [shape = 'u8[131072]{0}', space=vmem, size = 0x20000, scoped, tag = 'input window, operand 0']
    #allocation3 [shape = 's32[2]{0}', space=sflag, size = 0x8, scoped, tag = 'scoped memory for tpu_custom_call.1']
    #allocation4 [shape = 's32[2]{0}', space=sflag, size = 0x8, scoped, tag = 'scoped memory for tpu_custom_call.1']
    #allocation5 [shape = 'u8[131072]{0}', space=vmem, size = 0x20000, scoped, tag = 'input window, operand 1, single buffered']
    #allocation6 [shape = 's32[1]{0}', space=sflag, size = 0x4, scoped, tag = 'scoped memory for tpu_custom_call.1']
    #allocation7 [shape = 'u8[65536]{0}', space=vmem, size = 0x10000, scoped, tag = 'output window, operand 0']
    %8 = vsyncpa [#allocation3], 0
    %s9 = scalar_lea.sflag [#allocation3], 1
    %10 = vsyncpa %s9, 0
    %11 = vsyncpa [#allocation6], 0
    %12 = vsyncpa [#allocation4], 0
    %s13 = scalar_lea.sflag [#allocation4], 1
    %14 = vsyncpa %s13, 0
    loop: start=0, step=1, limit=4
    $region2: #{tpu_custom_call.1} parent=1 // loop_pre_header
      _
    $region3: #{tpu_custom_call.1} parent=1 // loop_header
      %s16 = sphi 0, %s20
      %p17 = scmp.ge.s32.totalorder %s16, 4
      %s23 = sphi 0, %s35
      %s24 = sphi 0, %s31
      %s25 = sphi 0, %s23
      %s26 = sphi 0, %s24
      %s27 = sphi 0, %s25
      %s28 = sphi 0, %s26
      %s40 = sphi 0, %s42
      %s43 = sphi 0, %s40
      %s44 = sphi 0, %s43
      %s60 = sphi 0, %s44
      %s64 = sphi 0, %s64
      %s66 = sphi 0, %s64
      %s67 = sphi 0, %s66
      %s81 = sphi 0, %s67
      %s87 = sphi 0, %s89
      %s90 = sphi 0, %s87
      %s91 = sphi 0, %s90
      %s107 = sphi 0, %s91
      %s115 = sphi 0, %s117
      %s118 = sphi 0, %s115
      %s119 = sphi 0, %s118
      %s135 = sphi 0, %s119
    $region4: #{tpu_custom_call.1} parent=1 // loop_header_branch
      %19 = sbr.rel (%p17) target = $region8
    $region5: #{tpu_custom_call.1} parent=1 // loop_body
      %s21 = ssub.s32 %s16, 1
      %s22 = ssub.s32 %s16, 2
      %s29 = sadd.s32 1, %s24
      %p30 = scmp.ge.s32.totalorder %s29, 1
      %s31 = scalar_select %p30, 0, %s29
      %s32 = sadd.s32 1, %s23
      %s33 = scalar_select %p30, %s32, %s23
      %p34 = scmp.ge.s32.totalorder %s33, 2
      %s35 = scalar_select %p34, 0, %s33
      %s36 = ssub.s32 %s23, %s35
      %s37 = ssub.s32 %s24, %s31
      %s38 = sor.u32 %s36, %s37
      %p39 = scmp.eq.s32.totalorder %s38, 0
      %s41 = sadd.s32 %s40, 1
      %s42 = scalar_select %p39, %s40, %s41
      %p45 = pneg %p39
      %p46 = scmp.eq.s32.totalorder %s16, 1
      %p47 = por %p45, %p46
      %p48 = scmp.ne.s32.totalorder %s40, %s43
      %p49 = scmp.eq.s32.totalorder %s16, 0
      %p50 = por %p48, %p49
      %p51 = scmp.ne.s32.totalorder %s40, %s43
      %p52 = scmp.eq.s32.totalorder %s21, 1
      %p53 = por %p51, %p52
      %p54 = scmp.ne.s32.totalorder %s43, %s44
      %p55 = scmp.eq.s32.totalorder %s21, 0
      %p56 = por %p54, %p55
      %p57 = scmp.ne.s32.totalorder %s43, %s44
      %p58 = scmp.eq.s32.totalorder %s22, 1
      %p59 = por %p57, %p58
      %p61 = scmp.ne.s32.totalorder %s44, %s60
      %p62 = scmp.eq.s32.totalorder %s22, 0
      %p63 = por %p61, %p62
      %s65 = sadd.s32 %s64, 1
      %p68 = scmp.eq.s32.totalorder %s16, 1
      %p69 = scmp.ne.s32.totalorder %s64, %s66
      %p70 = scmp.eq.s32.totalorder %s16, 0
      %p71 = por %p69, %p70
      %p72 = scmp.ne.s32.totalorder %s64, %s66
      %p73 = scmp.eq.s32.totalorder %s21, 1
      %p74 = por %p72, %p73
      %p75 = scmp.ne.s32.totalorder %s66, %s67
      %p76 = scmp.eq.s32.totalorder %s21, 0
      %p77 = por %p75, %p76
      %p78 = scmp.ne.s32.totalorder %s66, %s67
      %p79 = scmp.eq.s32.totalorder %s22, 1
      %p80 = por %p78, %p79
      %p82 = scmp.ne.s32.totalorder %s67, %s81
      %p83 = scmp.eq.s32.totalorder %s22, 0
      %p84 = por %p82, %p83
      %s85 = ssub.s32 %s23, %s35
      %p86 = scmp.eq.s32.totalorder %s85, 0
      %s88 = sadd.s32 %s87, 1
      %s89 = scalar_select %p86, %s87, %s88
      %p92 = pneg %p86
      %p93 = scmp.eq.s32.totalorder %s16, 1
      %p94 = por %p92, %p93
      %p95 = scmp.ne.s32.totalorder %s87, %s90
      %p96 = scmp.eq.s32.totalorder %s16, 0
      %p97 = por %p95, %p96
      %p98 = scmp.ne.s32.totalorder %s87, %s90
      %p99 = scmp.eq.s32.totalorder %s21, 1
      %p100 = por %p98, %p99
      %p101 = scmp.ne.s32.totalorder %s90, %s91
      %p102 = scmp.eq.s32.totalorder %s21, 0
      %p103 = por %p101, %p102
      %p104 = scmp.ne.s32.totalorder %s90, %s91
      %p105 = scmp.eq.s32.totalorder %s22, 1
      %p106 = por %p104, %p105
      %p108 = scmp.ne.s32.totalorder %s91, %s107
      %p109 = scmp.eq.s32.totalorder %s22, 0
      %p110 = por %p108, %p109
      %s111 = ssub.s32 %s23, %s35
      %s112 = ssub.s32 %s24, %s31
      %s113 = sor.u32 %s111, %s112
      %p114 = scmp.eq.s32.totalorder %s113, 0
      %s116 = sadd.s32 %s115, 1
      %s117 = scalar_select %p114, %s115, %s116
      %p120 = pneg %p114
      %p121 = scmp.eq.s32.totalorder %s16, 1
      %p122 = por %p120, %p121
      %p123 = scmp.ne.s32.totalorder %s115, %s118
      %p124 = scmp.eq.s32.totalorder %s16, 0
      %p125 = por %p123, %p124
      %p126 = scmp.ne.s32.totalorder %s115, %s118
      %p127 = scmp.eq.s32.totalorder %s21, 1
      %p128 = por %p126, %p127
      %p129 = scmp.ne.s32.totalorder %s118, %s119
      %p130 = scmp.eq.s32.totalorder %s21, 0
      %p131 = por %p129, %p130
      %p132 = scmp.ne.s32.totalorder %s118, %s119
      %p133 = scmp.eq.s32.totalorder %s22, 1
      %p134 = por %p132, %p133
      %p136 = scmp.ne.s32.totalorder %s119, %s135
      %p137 = scmp.eq.s32.totalorder %s22, 0
      %p138 = por %p136, %p137
      %p139 = scmp.le.s32.totalorder 1, %s16
      %p140 = scmp.lt.s32.totalorder %s16, 3
      %p141 = pnand %p139, %p140
      %p142 = pneg %p141
      // Predicated region
      $region9: #{tpu_custom_call.1} parent=5 // pred_check
        _
      $region10: #{tpu_custom_call.1} parent=5 // pred_check_branch
        %144 = sbr.rel (%p141) target = $region12
      $region11: #{tpu_custom_call.1} parent=5 // pred_region
        %s145 = ssub.s32 %s16, 1
        // Predicated region
        $region13: #{tpu_custom_call.1} parent=11 // pred_check
          %p146 = pneg %p77
        $region14: #{tpu_custom_call.1} parent=11 // pred_check_branch
          %148 = sbr.rel (%p146) target = $region16
        $region15: #{tpu_custom_call.1} parent=11 // pred_region
          %s150 = ssub.s32 4096, 4096
          %151 = vsyncadd [#allocation6], %s150
          %s152 = sshll.u32 [#allocation5], 4
          %s153 = int_to_ptr.vmem [resolvable:$true] %s152
          %158 = dma.hbm_to_vmem [thread:$0]  %s1, 4096, %s153, [#allocation6], 64, 64, 4
        $region16: #{tpu_custom_call.1} parent=11 // pred_fallthru
          _
      $region12: #{tpu_custom_call.1} parent=5 // pred_fallthru
        _
      %p159 = scmp.lt.s32.totalorder %s16, 2
      // Predicated region
      $region17: #{tpu_custom_call.1} parent=5 // pred_check
        %p160 = pneg %p159
      $region18: #{tpu_custom_call.1} parent=5 // pred_check_branch
        %162 = sbr.rel (%p160) target = $region20
      $region19: #{tpu_custom_call.1} parent=5 // pred_region
        // Predicated region
        $region21: #{tpu_custom_call.1} parent=19 // pred_check
          %p163 = pneg %p50
        $region22: #{tpu_custom_call.1} parent=19 // pred_check_branch
          %165 = sbr.rel (%p163) target = $region24
        $region23: #{tpu_custom_call.1} parent=19 // pred_region
          %s166 = sand.u32 %s40, 1
          %s167 = scalar_lea.sflag [#allocation3], %s166
          %s168 = sand.u32 %s40, 1
          %s169 = smul.addr %s168, 128
          %s170 = scalar_lea.vmem [#allocation2], %s169
          %s171 = smul.u32 8, %s24
          %s173 = ssub.s32 2048, 2048
          %174 = vsyncadd %s167, %s173
          %s175 = smul.addr %s171, 4
          %s176 = smul.addr %s23, 32
          %s177 = sadd.s32 %s175, %s176
          %s178 = smul.addr %s177, 64
          %s179 = scalar_lea.hbm %s0, %s178
          %s180 = sshll.u32 %s170, 4
          %s181 = int_to_ptr.vmem [resolvable:$true] %s180
          %186 = dma.hbm_to_vmem [thread:$0]  %s179, 2048, %s181, %s167, 256, 256, 16
        $region24: #{tpu_custom_call.1} parent=19 // pred_fallthru
          _
        // Predicated region
        $region25: #{tpu_custom_call.1} parent=19 // pred_check
          %p187 = pneg %p97
        $region26: #{tpu_custom_call.1} parent=19 // pred_check_branch
          %189 = sbr.rel (%p187) target = $region28
        $region27: #{tpu_custom_call.1} parent=19 // pred_region
          %p190 = scmp.lt.s32.totalorder %s23, 1
          %s191 = scalar_select %p190, %s23, 1
          %s192 = scalar_lea.vmem %s2, %s191
        $region28: #{tpu_custom_call.1} parent=19 // pred_fallthru
          _
      $region20: #{tpu_custom_call.1} parent=5 // pred_fallthru
        _
      %p193 = scmp.le.s32.totalorder 1, %s16
      %p194 = scmp.lt.s32.totalorder %s16, 3
      %p195 = pnand %p193, %p194
      %p196 = pneg %p195
      // Predicated region
      $region29: #{tpu_custom_call.1} parent=5 // pred_check
        _
      $region30: #{tpu_custom_call.1} parent=5 // pred_check_branch
        %198 = sbr.rel (%p195) target = $region32
      $region31: #{tpu_custom_call.1} parent=5 // pred_region
        %s199 = ssub.s32 %s16, 1
        %s200 = sand.u32 %s43, 1
        %s201 = scalar_lea.sflag [#allocation3], %s200
        %s202 = sand.u32 %s43, 1
        %s203 = smul.addr %s202, 128
        %s204 = scalar_lea.vmem [#allocation2], %s203
        // Predicated region
        $region33: #{tpu_custom_call.1} parent=31 // pred_check
          %p205 = pneg %p56
        $region34: #{tpu_custom_call.1} parent=31 // pred_check_branch
          %207 = sbr.rel (%p205) target = $region36
        $region35: #{tpu_custom_call.1} parent=31 // pred_region
          %208 = dma.done %s201, 2048
        $region36: #{tpu_custom_call.1} parent=31 // pred_fallthru
          _
        // Predicated region
        $region37: #{tpu_custom_call.1} parent=31 // pred_check
          %p209 = pneg %p77
        $region38: #{tpu_custom_call.1} parent=31 // pred_check_branch
          %211 = sbr.rel (%p209) target = $region40
        $region39: #{tpu_custom_call.1} parent=31 // pred_region
          %212 = dma.done [#allocation6], 4096
        $region40: #{tpu_custom_call.1} parent=31 // pred_fallthru
          _
        %s213 = sand.u32 %s43, 1
        %s214 = scalar_lea.sflag [#allocation3], %s213
        %s215 = sand.u32 %s43, 1
        %s216 = smul.addr %s215, 128
        %s217 = scalar_lea.vmem [#allocation2], %s216
        %p218 = pneg %p56
        %p219 = pneg %p53
        %p220 = pneg %p77
        %p221 = pneg %p74
        %p222 = scmp.lt.s32.totalorder %s25, 1
        %s223 = scalar_select %p222, %s25, 1
        %s224 = scalar_lea.vmem %s2, %s223
        %p225 = pneg %p103
        %p226 = pneg %p100
        %p227 = pneg %p131
        %p228 = pneg %p128
        %s229 = sand.u32 %s118, 1
        %s230 = scalar_lea.sflag [#allocation4], %s229
        %s231 = sand.u32 %s118, 1
        %s232 = smul.addr %s231, 64
        %s233 = scalar_lea.vmem [#allocation7], %s232
        %s234 = smul.u32 8, %s26
        %p235 = scmp.lt.s32.totalorder %s25, 1
        %s236 = scalar_select %p235, %s25, 1
        %s237 = scalar_lea.vmem %s2, %s236
        %s238 = smul.u32 8, %s26
        %v240 = vld [vmem:[%s204] sm:$0xff]
        %v241 = vld [vmem:[%s204 + $0x8] sm:$0xff]
        %v242 = vld [vmem:[%s204 + $0x10] sm:$0xff]
        %v243 = vld [vmem:[%s204 + $0x18] sm:$0xff]
        %v244 = vld [vmem:[%s204 + $0x20] sm:$0xff]
        %v245 = vld [vmem:[%s204 + $0x28] sm:$0xff]
        %v246 = vld [vmem:[%s204 + $0x30] sm:$0xff]
        %v247 = vld [vmem:[%s204 + $0x38] sm:$0xff]
        %v248 = vld [vmem:[%s204 + $0x40] sm:$0xff]
        %v249 = vld [vmem:[%s204 + $0x48] sm:$0xff]
        %v250 = vld [vmem:[%s204 + $0x50] sm:$0xff]
        %v251 = vld [vmem:[%s204 + $0x58] sm:$0xff]
        %v252 = vld [vmem:[%s204 + $0x60] sm:$0xff]
        %v253 = vld [vmem:[%s204 + $0x68] sm:$0xff]
        %v254 = vld [vmem:[%s204 + $0x70] sm:$0xff]
        %v255 = vld [vmem:[%s204 + $0x78] sm:$0xff]
        %v256 = vld [vmem:[#allocation5] sm:$0xf]
        %v257 = vld [vmem:[#allocation5 + $0x4] sm:$0xf]
        %v258 = vld [vmem:[#allocation5 + $0x8] sm:$0xf]
        %v259 = vld [vmem:[#allocation5 + $0xc] sm:$0xf]
        %v260 = vld [vmem:[#allocation5 + $0x10] sm:$0xf]
        %v261 = vld [vmem:[#allocation5 + $0x14] sm:$0xf]
        %v262 = vld [vmem:[#allocation5 + $0x18] sm:$0xf]
        %v263 = vld [vmem:[#allocation5 + $0x1c] sm:$0xf]
        %v264 = vld [vmem:[#allocation5 + $0x20] sm:$0xf]
        %v265 = vld [vmem:[#allocation5 + $0x24] sm:$0xf]
        %v266 = vld [vmem:[#allocation5 + $0x28] sm:$0xf]
        %v267 = vld [vmem:[#allocation5 + $0x2c] sm:$0xf]
        %v268 = vld [vmem:[#allocation5 + $0x30] sm:$0xf]
        %v269 = vld [vmem:[#allocation5 + $0x34] sm:$0xf]
        %v270 = vld [vmem:[#allocation5 + $0x38] sm:$0xf]
        %v271 = vld [vmem:[#allocation5 + $0x3c] sm:$0xf]
        %v272 = vld [vmem:[#allocation5 + $0x40] sm:$0xf]
        %v273 = vld [vmem:[#allocation5 + $0x44] sm:$0xf]
        %v274 = vld [vmem:[#allocation5 + $0x48] sm:$0xf]
        %v275 = vld [vmem:[#allocation5 + $0x4c] sm:$0xf]
        %v276 = vld [vmem:[#allocation5 + $0x50] sm:$0xf]
        %v277 = vld [vmem:[#allocation5 + $0x54] sm:$0xf]
        %v278 = vld [vmem:[#allocation5 + $0x58] sm:$0xf]
        %v279 = vld [vmem:[#allocation5 + $0x5c] sm:$0xf]
        %v280 = vld [vmem:[#allocation5 + $0x60] sm:$0xf]
        %v281 = vld [vmem:[#allocation5 + $0x64] sm:$0xf]
        %v282 = vld [vmem:[#allocation5 + $0x68] sm:$0xf]
        %v283 = vld [vmem:[#allocation5 + $0x6c] sm:$0xf]
        %v284 = vld [vmem:[#allocation5 + $0x70] sm:$0xf]
        %v285 = vld [vmem:[#allocation5 + $0x74] sm:$0xf]
        %v286 = vld [vmem:[#allocation5 + $0x78] sm:$0xf]
        %v287 = vld [vmem:[#allocation5 + $0x7c] sm:$0xf]
        %v288 = vld [vmem:[#allocation5 + $0x80] sm:$0xf]
        %v289 = vld [vmem:[#allocation5 + $0x84] sm:$0xf]
        %v290 = vld [vmem:[#allocation5 + $0x88] sm:$0xf]
        %v291 = vld [vmem:[#allocation5 + $0x8c] sm:$0xf]
        %v292 = vld [vmem:[#allocation5 + $0x90] sm:$0xf]
        %v293 = vld [vmem:[#allocation5 + $0x94] sm:$0xf]
        %v294 = vld [vmem:[#allocation5 + $0x98] sm:$0xf]
        %v295 = vld [vmem:[#allocation5 + $0x9c] sm:$0xf]
        %v296 = vld [vmem:[#allocation5 + $0xa0] sm:$0xf]
        %v297 = vld [vmem:[#allocation5 + $0xa4] sm:$0xf]
        %v298 = vld [vmem:[#allocation5 + $0xa8] sm:$0xf]
        %v299 = vld [vmem:[#allocation5 + $0xac] sm:$0xf]
        %v300 = vld [vmem:[#allocation5 + $0xb0] sm:$0xf]
        %v301 = vld [vmem:[#allocation5 + $0xb4] sm:$0xf]
        %v302 = vld [vmem:[#allocation5 + $0xb8] sm:$0xf]
        %v303 = vld [vmem:[#allocation5 + $0xbc] sm:$0xf]
        %v304 = vld [vmem:[#allocation5 + $0xc0] sm:$0xf]
        %v305 = vld [vmem:[#allocation5 + $0xc4] sm:$0xf]
        %v306 = vld [vmem:[#allocation5 + $0xc8] sm:$0xf]
        %v307 = vld [vmem:[#allocation5 + $0xcc] sm:$0xf]
        %v308 = vld [vmem:[#allocation5 + $0xd0] sm:$0xf]
        %v309 = vld [vmem:[#allocation5 + $0xd4] sm:$0xf]
        %v310 = vld [vmem:[#allocation5 + $0xd8] sm:$0xf]
        %v311 = vld [vmem:[#allocation5 + $0xdc] sm:$0xf]
        %v312 = vld [vmem:[#allocation5 + $0xe0] sm:$0xf]
        %v313 = vld [vmem:[#allocation5 + $0xe4] sm:$0xf]
        %v314 = vld [vmem:[#allocation5 + $0xe8] sm:$0xf]
        %v315 = vld [vmem:[#allocation5 + $0xec] sm:$0xf]
        %v316 = vld [vmem:[#allocation5 + $0xf0] sm:$0xf]
        %v317 = vld [vmem:[#allocation5 + $0xf4] sm:$0xf]
        %v318 = vld [vmem:[#allocation5 + $0xf8] sm:$0xf]
        %v319 = vld [vmem:[#allocation5 + $0xfc] sm:$0xf]
        %v320 = vld [vmem:[%s237] sm:$0x1]
        %v322 = vlaneseq
        %v323 = vshrl.u32 %v322, 7
        %v324 = vsub.s32 0, %v323
        %v325 = vrot.slane %v320, %v324
        %v343 = vunpack.c.l.b16 %v240
        %v344 = vunpack.c.h.b16 %v240
        %v345 = vunpack.c.l.b16 %v241
        %v346 = vunpack.c.h.b16 %v241
        %v347 = vunpack.c.l.b16 %v242
        %v348 = vunpack.c.h.b16 %v242
        %v349 = vunpack.c.l.b16 %v243
        %v350 = vunpack.c.h.b16 %v243
        %v351 = vunpack.c.l.b16 %v244
        %v352 = vunpack.c.h.b16 %v244
        %v353 = vunpack.c.l.b16 %v245
        %v354 = vunpack.c.h.b16 %v245
        %v355 = vunpack.c.l.b16 %v246
        %v356 = vunpack.c.h.b16 %v246
        %v357 = vunpack.c.l.b16 %v247
        %v358 = vunpack.c.h.b16 %v247
        %v359 = vunpack.c.l.b16 %v248
        %v360 = vunpack.c.h.b16 %v248
        %v361 = vunpack.c.l.b16 %v249
        %v362 = vunpack.c.h.b16 %v249
        %v363 = vunpack.c.l.b16 %v250
        %v364 = vunpack.c.h.b16 %v250
        %v365 = vunpack.c.l.b16 %v251
        %v366 = vunpack.c.h.b16 %v251
        %v367 = vunpack.c.l.b16 %v252
        %v368 = vunpack.c.h.b16 %v252
        %v369 = vunpack.c.l.b16 %v253
        %v370 = vunpack.c.h.b16 %v253
        %v371 = vunpack.c.l.b16 %v254
        %v372 = vunpack.c.h.b16 %v254
        %v373 = vunpack.c.l.b16 %v255
        %v374 = vunpack.c.h.b16 %v255
        %v375 = vpack.c.b16 %v347, %v343
        %v376 = vpack.c.b16 %v348, %v344
        %v377 = vpack.c.b16 %v349, %v345
        %v378 = vpack.c.b16 %v350, %v346
        %v379 = vpack.c.b16 %v355, %v351
        %v380 = vpack.c.b16 %v356, %v352
        %v381 = vpack.c.b16 %v357, %v353
        %v382 = vpack.c.b16 %v358, %v354
        %v383 = vpack.c.b16 %v363, %v359
        %v384 = vpack.c.b16 %v364, %v360
        %v385 = vpack.c.b16 %v365, %v361
        %v386 = vpack.c.b16 %v366, %v362
        %v387 = vpack.c.b16 %v371, %v367
        %v388 = vpack.c.b16 %v372, %v368
        %v389 = vpack.c.b16 %v373, %v369
        %v390 = vpack.c.b16 %v374, %v370
        %v471 = vunpack.c.l.b16 %v256
        %v472 = vunpack.c.l.b16 %v257
        %v473 = vunpack.c.l.b16 %v258
        %v474 = vunpack.c.l.b16 %v259
        %v475 = vunpack.c.l.b16 %v260
        %v476 = vunpack.c.l.b16 %v261
        %v477 = vunpack.c.l.b16 %v262
        %v478 = vunpack.c.l.b16 %v263
        %v479 = vunpack.c.l.b16 %v264
        %v480 = vunpack.c.l.b16 %v265
        %v481 = vunpack.c.l.b16 %v266
        %v482 = vunpack.c.l.b16 %v267
        %v483 = vunpack.c.l.b16 %v268
        %v484 = vunpack.c.l.b16 %v269
        %v485 = vunpack.c.l.b16 %v270
        %v486 = vunpack.c.l.b16 %v271
        %v487 = vunpack.c.l.b16 %v272
        %v488 = vunpack.c.l.b16 %v273
        %v489 = vunpack.c.l.b16 %v274
        %v490 = vunpack.c.l.b16 %v275
        %v491 = vunpack.c.l.b16 %v276
        %v492 = vunpack.c.l.b16 %v277
        %v493 = vunpack.c.l.b16 %v278
        %v494 = vunpack.c.l.b16 %v279
        %v495 = vunpack.c.l.b16 %v280
        %v496 = vunpack.c.l.b16 %v281
        %v497 = vunpack.c.l.b16 %v282
        %v498 = vunpack.c.l.b16 %v283
        %v499 = vunpack.c.l.b16 %v284
        %v500 = vunpack.c.l.b16 %v285
        %v501 = vunpack.c.l.b16 %v286
        %v502 = vunpack.c.l.b16 %v287
        %v503 = vunpack.c.l.b16 %v288
        %v504 = vunpack.c.l.b16 %v289
        %v505 = vunpack.c.l.b16 %v290
        %v506 = vunpack.c.l.b16 %v291
        %v507 = vunpack.c.l.b16 %v292
        %v508 = vunpack.c.l.b16 %v293
        %v509 = vunpack.c.l.b16 %v294
        %v510 = vunpack.c.l.b16 %v295
        %v511 = vunpack.c.l.b16 %v296
        %v512 = vunpack.c.l.b16 %v297
        %v513 = vunpack.c.l.b16 %v298
        %v514 = vunpack.c.l.b16 %v299
        %v515 = vunpack.c.l.b16 %v300
        %v516 = vunpack.c.l.b16 %v301
        %v517 = vunpack.c.l.b16 %v302
        %v518 = vunpack.c.l.b16 %v303
        %v519 = vunpack.c.l.b16 %v304
        %v520 = vunpack.c.l.b16 %v305
        %v521 = vunpack.c.l.b16 %v306
        %v522 = vunpack.c.l.b16 %v307
        %v523 = vunpack.c.l.b16 %v308
        %v524 = vunpack.c.l.b16 %v309
        %v525 = vunpack.c.l.b16 %v310
        %v526 = vunpack.c.l.b16 %v311
        %v527 = vunpack.c.l.b16 %v312
        %v528 = vunpack.c.l.b16 %v313
        %v529 = vunpack.c.l.b16 %v314
        %v530 = vunpack.c.l.b16 %v315
        %v531 = vunpack.c.l.b16 %v316
        %v532 = vunpack.c.l.b16 %v317
        %v533 = vunpack.c.l.b16 %v318
        %v534 = vunpack.c.l.b16 %v319
        %v535 = vpack.c.b16 %v472, %v471
        %v536 = vpack.c.b16 %v474, %v473
        %v537 = vpack.c.b16 %v476, %v475
        %v538 = vpack.c.b16 %v478, %v477
        %v539 = vpack.c.b16 %v480, %v479
        %v540 = vpack.c.b16 %v482, %v481
        %v541 = vpack.c.b16 %v484, %v483
        %v542 = vpack.c.b16 %v486, %v485
        %v543 = vpack.c.b16 %v488, %v487
        %v544 = vpack.c.b16 %v490, %v489
        %v545 = vpack.c.b16 %v492, %v491
        %v546 = vpack.c.b16 %v494, %v493
        %v547 = vpack.c.b16 %v496, %v495
        %v548 = vpack.c.b16 %v498, %v497
        %v549 = vpack.c.b16 %v500, %v499
        %v550 = vpack.c.b16 %v502, %v501
        %v551 = vpack.c.b16 %v504, %v503
        %v552 = vpack.c.b16 %v506, %v505
        %v553 = vpack.c.b16 %v508, %v507
        %v554 = vpack.c.b16 %v510, %v509
        %v555 = vpack.c.b16 %v512, %v511
        %v556 = vpack.c.b16 %v514, %v513
        %v557 = vpack.c.b16 %v516, %v515
        %v558 = vpack.c.b16 %v518, %v517
        %v559 = vpack.c.b16 %v520, %v519
        %v560 = vpack.c.b16 %v522, %v521
        %v561 = vpack.c.b16 %v524, %v523
        %v562 = vpack.c.b16 %v526, %v525
        %v563 = vpack.c.b16 %v528, %v527
        %v564 = vpack.c.b16 %v530, %v529
        %v565 = vpack.c.b16 %v532, %v531
        %v566 = vpack.c.b16 %v534, %v533
        %599 = vmatprep.subr.bf16.mxu0 0
        %600 = vmatpush1.bf16.msra.mxu0 %v535
        %601 = vmatprep.subr.bf16.mxu0 0
        %602 = vmatpush1.bf16.msra.mxu0 %v536
        %603 = vmatprep.subr.bf16.mxu0 0
        %604 = vmatpush1.bf16.msra.mxu0 %v537
        %605 = vmatprep.subr.bf16.mxu0 0
        %606 = vmatpush1.bf16.msra.mxu0 %v538
        %607 = vmatprep.subr.bf16.mxu0 0
        %608 = vmatpush1.bf16.msra.mxu0 %v539
        %609 = vmatprep.subr.bf16.mxu0 0
        %610 = vmatpush1.bf16.msra.mxu0 %v540
        %611 = vmatprep.subr.bf16.mxu0 0
        %612 = vmatpush1.bf16.msra.mxu0 %v541
        %613 = vmatprep.subr.bf16.mxu0 0
        %614 = vmatpush1.bf16.msra.mxu0 %v542
        %615 = vmatprep.subr.bf16.mxu0 0
        %616 = vmatpush1.bf16.msra.mxu0 %v543
        %617 = vmatprep.subr.bf16.mxu0 0
        %618 = vmatpush1.bf16.msra.mxu0 %v544
        %619 = vmatprep.subr.bf16.mxu0 0
        %620 = vmatpush1.bf16.msra.mxu0 %v545
        %621 = vmatprep.subr.bf16.mxu0 0
        %622 = vmatpush1.bf16.msra.mxu0 %v546
        %623 = vmatprep.subr.bf16.mxu0 0
        %624 = vmatpush1.bf16.msra.mxu0 %v547
        %625 = vmatprep.subr.bf16.mxu0 0
        %626 = vmatpush1.bf16.msra.mxu0 %v548
        %627 = vmatprep.subr.bf16.mxu0 0
        %628 = vmatpush1.bf16.msra.mxu0 %v549
        %629 = vmatprep.subr.bf16.mxu0 0
        %630 = vmatpush1.bf16.msra.mxu0 %v550
        %631 = vmatprep.mubr.bf16.mxu0 %v376
        %632 = vmatmul.mubr.bf16.gmra.mrb[0].mxu0 %v375
        %v633 = vpop.f32.mrb[0].mxu0
        %v634 = vadd.f32 %v325, %v633
        %v635 = vpop.f32.mrb[0].mxu0
        %v636 = vpop.f32.mrb[0].mxu0
        %v637 = vadd.f32 %v325, %v636
        %v638 = vpop.f32.mrb[0].mxu0
        %639 = vmatprep.mubr.bf16.mxu0 %v380
        %640 = vmatmul.mubr.bf16.gmra.mrb[0].mxu0 %v379
        %v641 = vpop.f32.mrb[0].mxu0
        %v642 = vadd.f32 %v325, %v641
        %v643 = vpop.f32.mrb[0].mxu0
        %v644 = vpop.f32.mrb[0].mxu0
        %v645 = vadd.f32 %v325, %v644
        %v646 = vpop.f32.mrb[0].mxu0
        %647 = vmatprep.mubr.bf16.mxu0 %v384
        %648 = vmatmul.mubr.bf16.gmra.mrb[0].mxu0 %v383
        %v649 = vpop.f32.mrb[0].mxu0
        %v650 = vadd.f32 %v325, %v649
        %v651 = vpop.f32.mrb[0].mxu0
        %v652 = vpop.f32.mrb[0].mxu0
        %v653 = vadd.f32 %v325, %v652
        %v654 = vpop.f32.mrb[0].mxu0
        %655 = vmatprep.mubr.bf16.mxu0 %v388
        %656 = vmatmul.mubr.bf16.gmra.mrb[0].mxu0 %v387
        %v657 = vpop.f32.mrb[0].mxu0
        %v658 = vadd.f32 %v325, %v657
        %v659 = vpop.f32.mrb[0].mxu0
        %v660 = vpop.f32.mrb[0].mxu0
        %v661 = vadd.f32 %v325, %v660
        %v662 = vpop.f32.mrb[0].mxu0
        %663 = vdwg.mxu0
        %664 = vmatprep.subr.bf16.mxu0 0
        %665 = vmatpush1.bf16.msra.mxu0 %v551
        %666 = vmatprep.subr.bf16.mxu0 0
        %667 = vmatpush1.bf16.msra.mxu0 %v552
        %668 = vmatprep.subr.bf16.mxu0 0
        %669 = vmatpush1.bf16.msra.mxu0 %v553
        %670 = vmatprep.subr.bf16.mxu0 0
        %671 = vmatpush1.bf16.msra.mxu0 %v554
        %672 = vmatprep.subr.bf16.mxu0 0
        %673 = vmatpush1.bf16.msra.mxu0 %v555
        %674 = vmatprep.subr.bf16.mxu0 0
        %675 = vmatpush1.bf16.msra.mxu0 %v556
        %676 = vmatprep.subr.bf16.mxu0 0
        %677 = vmatpush1.bf16.msra.mxu0 %v557
        %678 = vmatprep.subr.bf16.mxu0 0
        %679 = vmatpush1.bf16.msra.mxu0 %v558
        %680 = vmatprep.subr.bf16.mxu0 0
        %681 = vmatpush1.bf16.msra.mxu0 %v559
        %682 = vmatprep.subr.bf16.mxu0 0
        %683 = vmatpush1.bf16.msra.mxu0 %v560
        %684 = vmatprep.subr.bf16.mxu0 0
        %685 = vmatpush1.bf16.msra.mxu0 %v561
        %686 = vmatprep.subr.bf16.mxu0 0
        %687 = vmatpush1.bf16.msra.mxu0 %v562
        %688 = vmatprep.subr.bf16.mxu0 0
        %689 = vmatpush1.bf16.msra.mxu0 %v563
        %690 = vmatprep.subr.bf16.mxu0 0
        %691 = vmatpush1.bf16.msra.mxu0 %v564
        %692 = vmatprep.subr.bf16.mxu0 0
        %693 = vmatpush1.bf16.msra.mxu0 %v565
        %694 = vmatprep.subr.bf16.mxu0 0
        %695 = vmatpush1.bf16.msra.mxu0 %v566
        %696 = vmatprep.mubr.bf16.mxu0 %v378
        %697 = vmatmul.mubr.bf16.gmra.mrb[0].mxu0 %v377
        %v698 = vpop.f32.mrb[0].mxu0
        %v699 = vadd.f32 %v634, %v698
        %v700 = vpop.f32.mrb[0].mxu0
        %v701 = vpop.f32.mrb[0].mxu0
        %v702 = vadd.f32 %v637, %v701
        %v703 = vpop.f32.mrb[0].mxu0
        %704 = vmatprep.mubr.bf16.mxu0 %v382
        %705 = vmatmul.mubr.bf16.gmra.mrb[0].mxu0 %v381
        %v706 = vpop.f32.mrb[0].mxu0
        %v707 = vadd.f32 %v642, %v706
        %v708 = vpop.f32.mrb[0].mxu0
        %v709 = vpop.f32.mrb[0].mxu0
        %v710 = vadd.f32 %v645, %v709
        %v711 = vpop.f32.mrb[0].mxu0
        %712 = vmatprep.mubr.bf16.mxu0 %v386
        %713 = vmatmul.mubr.bf16.gmra.mrb[0].mxu0 %v385
        %v714 = vpop.f32.mrb[0].mxu0
        %v715 = vadd.f32 %v650, %v714
        %v716 = vpop.f32.mrb[0].mxu0
        %v717 = vpop.f32.mrb[0].mxu0
        %v718 = vadd.f32 %v653, %v717
        %v719 = vpop.f32.mrb[0].mxu0
        %720 = vmatprep.mubr.bf16.mxu0 %v390
        %721 = vmatmul.mubr.bf16.gmra.mrb[0].mxu0 %v389
        %v722 = vpop.f32.mrb[0].mxu0
        %v723 = vadd.f32 %v658, %v722
        %v724 = vpop.f32.mrb[0].mxu0
        %v725 = vpop.f32.mrb[0].mxu0
        %v726 = vadd.f32 %v661, %v725
        %v727 = vpop.f32.mrb[0].mxu0
        %728 = vdwg.mxu0
        %729 = vst [vmem:[%s233] sm:$0xff] %v699
        %730 = vst [vmem:[%s233 + $0x8] sm:$0xff] %v702
        %731 = vst [vmem:[%s233 + $0x10] sm:$0xff] %v707
        %732 = vst [vmem:[%s233 + $0x18] sm:$0xff] %v710
        %733 = vst [vmem:[%s233 + $0x20] sm:$0xff] %v715
        %734 = vst [vmem:[%s233 + $0x28] sm:$0xff] %v718
        %735 = vst [vmem:[%s233 + $0x30] sm:$0xff] %v723
        %736 = vst [vmem:[%s233 + $0x38] sm:$0xff] %v726
        %s737 = sand.u32 %s118, 1
        %s738 = scalar_lea.sflag [#allocation4], %s737
        %s739 = sand.u32 %s118, 1
        %s740 = smul.addr %s739, 64
        %s741 = scalar_lea.vmem [#allocation7], %s740
        // Predicated region
        $region41: #{tpu_custom_call.1} parent=31 // pred_check
          %p742 = pneg %p128
        $region42: #{tpu_custom_call.1} parent=31 // pred_check_branch
          %744 = sbr.rel (%p742) target = $region44
        $region43: #{tpu_custom_call.1} parent=31 // pred_region
          %s745 = smul.u32 8, %s26
          %s747 = ssub.s32 1024, 1024
          %748 = vsyncadd %s738, %s747
          %s749 = smul.addr %s25, 8
          %s750 = sadd.s32 %s745, %s749
          %s751 = smul.addr %s750, 128
          %s752 = scalar_lea.hbm %s3, %s751
          %s753 = sshll.u32 %s741, 4
          %s754 = int_to_ptr.vmem [resolvable:$true] %s753
          %759 = dma.vmem_to_hbm [thread:$0]  %s754, 1024, %s752, %s738, 128, 128, 8
        $region44: #{tpu_custom_call.1} parent=31 // pred_fallthru
          _
      $region32: #{tpu_custom_call.1} parent=5 // pred_fallthru
        _
      %p760 = scmp.le.s32.totalorder 2, %s16
      // Predicated region
      $region45: #{tpu_custom_call.1} parent=5 // pred_check
        %p761 = pneg %p760
      $region46: #{tpu_custom_call.1} parent=5 // pred_check_branch
        %763 = sbr.rel (%p761) target = $region48
      $region47: #{tpu_custom_call.1} parent=5 // pred_region
        %s764 = ssub.s32 %s16, 2
        // Predicated region
        $region49: #{tpu_custom_call.1} parent=47 // pred_check
          %p765 = pneg %p134
        $region50: #{tpu_custom_call.1} parent=47 // pred_check_branch
          %767 = sbr.rel (%p765) target = $region52
        $region51: #{tpu_custom_call.1} parent=47 // pred_region
          %s768 = sand.u32 %s119, 1
          %s769 = scalar_lea.sflag [#allocation4], %s768
          %s770 = sand.u32 %s119, 1
          %s771 = smul.addr %s770, 64
          %s772 = scalar_lea.vmem [#allocation7], %s771
          %773 = dma.done %s769, 1024
        $region52: #{tpu_custom_call.1} parent=47 // pred_fallthru
          _
      $region48: #{tpu_custom_call.1} parent=5 // pred_fallthru
        _
    $region6: #{tpu_custom_call.1} parent=1 // loop_footer
      %s20 = sadd.s32 1, %s16
    $region7: #{tpu_custom_call.1} parent=1 // loop_footer_branch
      %15 = sbr.rel target = $region3
    $region8: #{tpu_custom_call.1} parent=1 // loop_exit
      _
    %774 = vsyncpa [#allocation3], 1
    %s775 = scalar_lea.sflag [#allocation3], 1
    %776 = vsyncpa %s775, 1
    %777 = vsyncpa [#allocation6], 1
    %778 = vsyncpa [#allocation4], 1
    %s779 = scalar_lea.sflag [#allocation4], 1
    %780 = vsyncpa %s779, 1

</llo_original>
